<compile_context>
chip_gen: v7x
topology: tpu7x:2x2x1
jax: 0.10.0
libtpu: 0.0.40
codegen_flags: <defaults>
</compile_context>

<pallas_src>
import functools
import math

import jax
import jax.numpy as jnp
from jax.experimental import pallas as pl
from jax.experimental.pallas import tpu as pltpu


def _round_up(x, m):
    return ((x + m - 1) // m) * m


# -----------------------------------------------------------------------------
# Pallas kernel: fused dense forward pass of one RAM timestep.
# -----------------------------------------------------------------------------
def _ram_kernel(std, logpi_c, hidden, d_phi, num_classes, out_pad,
                # inputs
                xin_ref,
                w12_ref, b12_ref, w34_ref, b34_ref,
                wcore_ref, bcore_ref, whead_ref, bhead_ref,
                wlt_ref, blt_ref,
                # output
                out_ref):
    f32 = jnp.float32
    dot = lambda a, b: jnp.dot(a, b, preferred_element_type=f32)

    xin = xin_ref[...]                              # (B, in_w) packed slab
    h_prev = xin[:, :hidden]                        # lanes [0, hidden)
    noff = hidden + d_phi + 2
    noise = xin[:, noff:noff + 2]                   # lanes [noff, noff+2)

    # ---- GlimpseNetwork: fc1/fc2 fused as block-diag over the padded slab ----
    z1 = jnp.maximum(dot(xin, w12_ref[...]) + b12_ref[...], 0.0)   # [phi_out | l_out]
    g_t = jnp.maximum(dot(z1, w34_ref[...]) + b34_ref[...], 0.0)   # relu(what + where)

    # ---- CoreNetworkRNN: h_t = relu([g_t | h_prev] @ [wi2h; wh2h] + b) ----
    core_in = jnp.concatenate([g_t, h_prev], axis=1)
    h_t = jnp.maximum(dot(core_in, wcore_ref[...]) + bcore_ref[...], 0.0)

    # ---- Heads: single dot for [wloc | wb | wc] ----
    heads = dot(h_t, whead_ref[...]) + bhead_ref[...]
    nloc = wlt_ref.shape[0]                         # hidden // 2
    feat = jnp.maximum(heads[:, :nloc], 0.0)
    b_t = heads[:, nloc:nloc + 1]
    logits = heads[:, nloc + 1:nloc + 1 + num_classes]

    # LocationNetwork (Gaussian policy, reparameterized sample)
    mu = jnp.tanh(dot(feat, wlt_ref[...]) + blt_ref[...])
    l_t = jnp.clip(mu + std * noise, -1.0, 1.0)     # clamp AFTER log_prob semantics
    # Normal(mu, std).log_prob(mu + std*noise) summed over the 2 coordinates:
    log_pi = -0.5 * jnp.sum(noise * noise, axis=1, keepdims=True) + logpi_c

    # ActionNetwork: log-softmax over classes
    m = jnp.max(logits, axis=1, keepdims=True)
    z = logits - m
    logp = z - jnp.log(jnp.sum(jnp.exp(z), axis=1, keepdims=True))

    # ---- Single lane-dense output slab (one unmasked full-tile store) ----
    pieces = [h_t, logp, l_t, b_t, log_pi]
    if out_pad:
        pieces.append(jnp.zeros((out_ref.shape[0], out_pad), f32))
    out_ref[...] = jnp.concatenate(pieces, axis=1)


# -----------------------------------------------------------------------------
# Glimpse extraction (retina) — glue in plain JAX (data-dependent crops).
# -----------------------------------------------------------------------------
def _extract_patch(x, l, size):
    """Extract a size x size patch per image centered at denormalized l."""
    B, C, H, W = x.shape
    pad = size // 2
    xp = jnp.pad(x, ((0, 0), (0, 0), (pad, pad), (pad, pad)))
    # denormalize: [-1, 1] -> [0, H]  (l = [x(col), y(row)]); with pad = size//2
    # the center coord in the original image is the top-left coord in the padded one.
    start = (0.5 * ((l + 1.0) * H)).astype(jnp.int32)

    def slice_one(img, st):
        return jax.lax.dynamic_slice(img, (0, st[1], st[0]), (C, size, size))

    return jax.vmap(slice_one)(xp, start)


def foveate(x, l, g, k, s):
    """k patches of increasing size, avg-pooled back to g x g, concat + flatten."""
    B, C, H, W = x.shape
    patches = []
    size = g
    for _ in range(k):
        patches.append(_extract_patch(x, l, size))
        size = int(s * size)
    for i in range(1, len(patches)):
        factor = patches[i].shape[-1] // g
        patches[i] = patches[i].reshape(B, C, g, factor, g, factor).mean(axis=(3, 5))
    phi = jnp.concatenate(patches, axis=1)      # (B, k*C, g, g)
    return phi.reshape(B, -1).astype(jnp.float32)


# -----------------------------------------------------------------------------
# One-time parameter fusion (free at runtime; done outside the step).
# -----------------------------------------------------------------------------
def fuse_params(params, *, d_phi, hidden):
    """Fold 12 Linear layers into 5 fused (and slab-padded) weight matrices."""
    f32 = jnp.float32
    h_g = params["w1"].shape[1]
    h_l = params["w2"].shape[1]
    in_w = _round_up(hidden + d_phi + 4, 128)   # slab: [h_prev | phi | l | noise | 0]

    w12 = jnp.zeros((in_w, h_g + h_l), f32)
    w12 = w12.at[hidden:hidden + d_phi, :h_g].set(params["w1"])
    w12 = w12.at[hidden + d_phi:hidden + d_phi + 2, h_g:].set(params["w2"])
    b12 = jnp.concatenate([params["b1"], params["b2"]], axis=1)

    w34 = jnp.concatenate([params["w3"], params["w4"]], axis=0)       # (h_g+h_l, hidden)
    b34 = params["b3"] + params["b4"]

    wcore = jnp.concatenate([params["wi2h"], params["wh2h"]], axis=0)  # (2*hidden, hidden)
    bcore = params["bi2h"] + params["bh2h"]

    whead = jnp.concatenate([params["wloc"], params["wb"], params["wc"]], axis=1)
    bhead = jnp.concatenate([params["bloc"], params["bb"], params["bc"]], axis=1)

    return dict(w12=w12, b12=b12, w34=w34, b34=b34, wcore=wcore, bcore=bcore,
                whead=whead, bhead=bhead, wlt=params["wlt"], blt=params["blt"])


# -----------------------------------------------------------------------------
# Wrapper: one RAM timestep.
# -----------------------------------------------------------------------------
def recurrent_attention_step(fused, x, l_t_prev, h_t_prev, noise,
                             *, g, k, s, std, last=False):
    B = x.shape[0]
    hidden = h_t_prev.shape[1]
    nloc = fused["wlt"].shape[0]
    num_classes = fused["whead"].shape[1] - nloc - 1

    phi = foveate(x, l_t_prev, g, k, s)        # (B, k*g*g*C) — data-dependent glue
    d_phi = phi.shape[1]

    # Pack all dense inputs into one lane-dense slab: [h_prev | phi | l_prev | noise | 0]
    in_w = fused["w12"].shape[0]
    in_pad = in_w - (hidden + d_phi + 4)
    xin_parts = [h_t_prev.astype(jnp.float32), phi,
                 l_t_prev.astype(jnp.float32), noise.astype(jnp.float32)]
    if in_pad:
        xin_parts.append(jnp.zeros((B, in_pad), jnp.float32))
    xin = jnp.concatenate(xin_parts, axis=1)

    out_w = _round_up(hidden + num_classes + 4, 128)
    out_pad = out_w - (hidden + num_classes + 4)

    inputs = [xin,
              fused["w12"], fused["b12"], fused["w34"], fused["b34"],
              fused["wcore"], fused["bcore"], fused["whead"], fused["bhead"],
              fused["wlt"], fused["blt"]]

    logpi_c = -(2.0 * math.log(float(std)) + math.log(2.0 * math.pi))
    kernel = functools.partial(_ram_kernel, float(std), logpi_c,
                               hidden, d_phi, num_classes, out_pad)

    flops = 2 * B * (fused["w12"].shape[0] * fused["w12"].shape[1]
                     + fused["w34"].shape[0] * fused["w34"].shape[1]
                     + fused["wcore"].shape[0] * fused["wcore"].shape[1]
                     + fused["whead"].shape[0] * fused["whead"].shape[1]
                     + fused["wlt"].shape[0] * fused["wlt"].shape[1])
    bytes_accessed = (sum(int(a.size) * a.dtype.itemsize for a in inputs)
                      + B * out_w * 4)
    cost = pl.CostEstimate(flops=flops,
                           transcendentals=B * (num_classes + 3),
                           bytes_accessed=bytes_accessed)

    vmem = pl.BlockSpec(memory_space=pltpu.MemorySpace.VMEM)
    slab = pl.pallas_call(
        kernel,
        out_shape=jax.ShapeDtypeStruct((B, out_w), jnp.float32),
        in_specs=[vmem] * len(inputs),
        out_specs=vmem,
        cost_estimate=cost,
    )(*inputs)

    # Slice the lane-dense output slab apart (cheap XLA ops outside the kernel).
    h_t = slab[:, :hidden]
    log_probas = slab[:, hidden:hidden + num_classes]
    l_t = slab[:, hidden + num_classes:hidden + num_classes + 2]
    b_t = slab[:, hidden + num_classes + 2]        # .squeeze()
    log_pi = slab[:, hidden + num_classes + 3]     # summed over coords -> (B,)

    if last:
        return h_t, l_t, b_t, log_probas, log_pi
    return h_t, l_t, b_t, log_pi


# -----------------------------------------------------------------------------
# Deterministic parameter init (PyTorch nn.Linear default: U(-1/sqrt(in), +)).
# Weights stored as (in, out) so the kernel does x @ W + b.
# -----------------------------------------------------------------------------
def _linear(key, din, dout):
    kw, kb = jax.random.split(key)
    bound = 1.0 / math.sqrt(din)
    w = jax.random.uniform(kw, (din, dout), jnp.float32, -bound, bound)
    b = jax.random.uniform(kb, (1, dout), jnp.float32, -bound, bound)
    return w, b


if __name__ == "__main__":
    key = jax.random.PRNGKey(0)

    # Small, consistent shapes.
    B, C, H, W = 2, 1, 16, 16
    g, k, s = 4, 2, 2
    h_g, h_l = 16, 16
    hidden_size = h_g + h_l            # g_t size == core hidden size (32)
    num_classes = 10
    std = 0.17

    D_in = k * g * g * C               # 32

    keys = jax.random.split(key, 16)
    params = {}
    params["w1"], params["b1"] = _linear(keys[0], D_in, h_g)            # phi fc
    params["w2"], params["b2"] = _linear(keys[1], 2, h_l)               # loc fc
    params["w3"], params["b3"] = _linear(keys[2], h_g, hidden_size)     # what
    params["w4"], params["b4"] = _linear(keys[3], h_l, hidden_size)     # where
    params["wi2h"], params["bi2h"] = _linear(keys[4], hidden_size, hidden_size)
    params["wh2h"], params["bh2h"] = _linear(keys[5], hidden_size, hidden_size)
    params["wloc"], params["bloc"] = _linear(keys[6], hidden_size, hidden_size // 2)
    params["wlt"], params["blt"] = _linear(keys[7], hidden_size // 2, 2)
    params["wb"], params["bb"] = _linear(keys[8], hidden_size, 1)
    params["wc"], params["bc"] = _linear(keys[9], hidden_size, num_classes)

    # One-time weight fusion (block-diag / stacked / concatenated heads).
    fused = fuse_params(params, d_phi=D_in, hidden=hidden_size)

    x = jax.random.normal(keys[10], (B, C, H, W), jnp.float32)
    l_t_prev = jax.random.uniform(keys[11], (B, 2), jnp.float32, -1.0, 1.0)
    h_t_prev = jnp.zeros((B, hidden_size), jnp.float32)
    noise = jax.random.normal(keys[12], (B, 2), jnp.float32)   # N(0,1) for rsample

    step = jax.jit(lambda p, xx, ll, hh, nn: recurrent_attention_step(
        p, xx, ll, hh, nn, g=g, k=k, s=s, std=std, last=True))

    h_t, l_t, b_t, log_probas, log_pi = step(fused, x, l_t_prev, h_t_prev, noise)

    jax.block_until_ready((h_t, l_t, b_t, log_probas, log_pi))
    assert h_t.shape == (B, hidden_size)
    assert l_t.shape == (B, 2)
    assert b_t.shape == (B,)
    assert log_probas.shape == (B, num_classes)
    assert log_pi.shape == (B,)
    assert bool(jnp.all(jnp.isfinite(h_t))) and bool(jnp.all(jnp.isfinite(log_probas)))
    print("KERNEL_OK")
</pallas_src>

<mosaic_0001>
module attributes {stable_mosaic.version = 11 : i64} {
  func.func @_ram_kernel(%arg0: memref<2x128xf32, #tpu.memory_space<vmem>>, %arg1: memref<128x32xf32, #tpu.memory_space<vmem>>, %arg2: memref<1x32xf32, #tpu.memory_space<vmem>>, %arg3: memref<32x32xf32, #tpu.memory_space<vmem>>, %arg4: memref<1x32xf32, #tpu.memory_space<vmem>>, %arg5: memref<64x32xf32, #tpu.memory_space<vmem>>, %arg6: memref<1x32xf32, #tpu.memory_space<vmem>>, %arg7: memref<32x27xf32, #tpu.memory_space<vmem>>, %arg8: memref<1x27xf32, #tpu.memory_space<vmem>>, %arg9: memref<16x2xf32, #tpu.memory_space<vmem>>, %arg10: memref<1x2xf32, #tpu.memory_space<vmem>>, %arg11: memref<2x128xf32, #tpu.memory_space<vmem>>) attributes {dimension_semantics = [], scalar_prefetch = 0 : i64, scratch_operands = 0 : i64, tpu.core_type = #tpu.core_type<tc>} {
    %c0 = arith.constant 0 : index
    %c0_0 = arith.constant 0 : index
    %0 = vector.load %arg0[%c0, %c0_0] : memref<2x128xf32, #tpu.memory_space<vmem>>, vector<2x128xf32>
    %1 = vector.extract_strided_slice %0 {offsets = [0, 0], sizes = [2, 32], strides = [1, 1]} : vector<2x128xf32> to vector<2x32xf32>
    %2 = vector.extract_strided_slice %0 {offsets = [0, 66], sizes = [2, 2], strides = [1, 1]} : vector<2x128xf32> to vector<2x2xf32>
    %c0_1 = arith.constant 0 : index
    %c0_2 = arith.constant 0 : index
    %3 = vector.load %arg1[%c0_1, %c0_2] : memref<128x32xf32, #tpu.memory_space<vmem>>, vector<128x32xf32>
    %cst = arith.constant dense<0.000000e+00> : vector<2x32xf32>
    %4 = tpu.matmul %0, %3, %cst {dimension_numbers = #tpu.dot_dimension_numbers<[1], [0], [0], [1], [0, 0, 1, 1], [], []>} : vector<2x128xf32>, vector<128x32xf32>, vector<2x32xf32> -> vector<2x32xf32>
    %c0_3 = arith.constant 0 : index
    %c0_4 = arith.constant 0 : index
    %5 = vector.load %arg2[%c0_3, %c0_4] : memref<1x32xf32, #tpu.memory_space<vmem>>, vector<1x32xf32>
    %6 = vector.broadcast %5 : vector<1x32xf32> to vector<2x32xf32>
    %7 = arith.addf %4, %6 : vector<2x32xf32>
    %cst_5 = arith.constant 0.000000e+00 : f32
    %8 = vector.broadcast %cst_5 : f32 to vector<2x32xf32>
    %9 = arith.maximumf %7, %8 : vector<2x32xf32>
    %c0_6 = arith.constant 0 : index
    %c0_7 = arith.constant 0 : index
    %10 = vector.load %arg3[%c0_6, %c0_7] : memref<32x32xf32, #tpu.memory_space<vmem>>, vector<32x32xf32>
    %cst_8 = arith.constant dense<0.000000e+00> : vector<2x32xf32>
    %11 = tpu.matmul %9, %10, %cst_8 {dimension_numbers = #tpu.dot_dimension_numbers<[1], [0], [0], [1], [0, 0, 1, 1], [], []>} : vector<2x32xf32>, vector<32x32xf32>, vector<2x32xf32> -> vector<2x32xf32>
    %c0_9 = arith.constant 0 : index
    %c0_10 = arith.constant 0 : index
    %12 = vector.load %arg4[%c0_9, %c0_10] : memref<1x32xf32, #tpu.memory_space<vmem>>, vector<1x32xf32>
    %13 = vector.broadcast %12 : vector<1x32xf32> to vector<2x32xf32>
    %14 = arith.addf %11, %13 : vector<2x32xf32>
    %cst_11 = arith.constant 0.000000e+00 : f32
    %15 = vector.broadcast %cst_11 : f32 to vector<2x32xf32>
    %16 = arith.maximumf %14, %15 : vector<2x32xf32>
    %17 = tpu.concatenate %16, %1 in 1 : vector<2x32xf32>, vector<2x32xf32> -> vector<2x64xf32>
    %c0_12 = arith.constant 0 : index
    %c0_13 = arith.constant 0 : index
    %18 = vector.load %arg5[%c0_12, %c0_13] : memref<64x32xf32, #tpu.memory_space<vmem>>, vector<64x32xf32>
    %cst_14 = arith.constant dense<0.000000e+00> : vector<2x32xf32>
    %19 = tpu.matmul %17, %18, %cst_14 {dimension_numbers = #tpu.dot_dimension_numbers<[1], [0], [0], [1], [0, 0, 1, 1], [], []>} : vector<2x64xf32>, vector<64x32xf32>, vector<2x32xf32> -> vector<2x32xf32>
    %c0_15 = arith.constant 0 : index
    %c0_16 = arith.constant 0 : index
    %20 = vector.load %arg6[%c0_15, %c0_16] : memref<1x32xf32, #tpu.memory_space<vmem>>, vector<1x32xf32>
    %21 = vector.broadcast %20 : vector<1x32xf32> to vector<2x32xf32>
    %22 = arith.addf %19, %21 : vector<2x32xf32>
    %cst_17 = arith.constant 0.000000e+00 : f32
    %23 = vector.broadcast %cst_17 : f32 to vector<2x32xf32>
    %24 = arith.maximumf %22, %23 : vector<2x32xf32>
    %c0_18 = arith.constant 0 : index
    %c0_19 = arith.constant 0 : index
    %25 = vector.load %arg7[%c0_18, %c0_19] : memref<32x27xf32, #tpu.memory_space<vmem>>, vector<32x27xf32>
    %cst_20 = arith.constant dense<0.000000e+00> : vector<2x27xf32>
    %26 = tpu.matmul %24, %25, %cst_20 {dimension_numbers = #tpu.dot_dimension_numbers<[1], [0], [0], [1], [0, 0, 1, 1], [], []>} : vector<2x32xf32>, vector<32x27xf32>, vector<2x27xf32> -> vector<2x27xf32>
    %c0_21 = arith.constant 0 : index
    %c0_22 = arith.constant 0 : index
    %27 = vector.load %arg8[%c0_21, %c0_22] : memref<1x27xf32, #tpu.memory_space<vmem>>, vector<1x27xf32>
    %28 = vector.broadcast %27 : vector<1x27xf32> to vector<2x27xf32>
    %29 = arith.addf %26, %28 : vector<2x27xf32>
    %30 = vector.extract_strided_slice %29 {offsets = [0, 0], sizes = [2, 16], strides = [1, 1]} : vector<2x27xf32> to vector<2x16xf32>
    %cst_23 = arith.constant 0.000000e+00 : f32
    %31 = vector.broadcast %cst_23 : f32 to vector<2x16xf32>
    %32 = arith.maximumf %30, %31 : vector<2x16xf32>
    %33 = vector.extract_strided_slice %29 {offsets = [0, 16], sizes = [2, 1], strides = [1, 1]} : vector<2x27xf32> to vector<2x1xf32>
    %34 = vector.extract_strided_slice %29 {offsets = [0, 17], sizes = [2, 10], strides = [1, 1]} : vector<2x27xf32> to vector<2x10xf32>
    %c0_24 = arith.constant 0 : index
    %c0_25 = arith.constant 0 : index
    %35 = vector.load %arg9[%c0_24, %c0_25] : memref<16x2xf32, #tpu.memory_space<vmem>>, vector<16x2xf32>
    %cst_26 = arith.constant dense<0.000000e+00> : vector<2x2xf32>
    %36 = tpu.matmul %32, %35, %cst_26 {dimension_numbers = #tpu.dot_dimension_numbers<[1], [0], [0], [1], [0, 0, 1, 1], [], []>} : vector<2x16xf32>, vector<16x2xf32>, vector<2x2xf32> -> vector<2x2xf32>
    %c0_27 = arith.constant 0 : index
    %c0_28 = arith.constant 0 : index
    %37 = vector.load %arg10[%c0_27, %c0_28] : memref<1x2xf32, #tpu.memory_space<vmem>>, vector<1x2xf32>
    %38 = vector.broadcast %37 : vector<1x2xf32> to vector<2x2xf32>
    %39 = arith.addf %36, %38 : vector<2x2xf32>
    %40 = math.tanh %39 : vector<2x2xf32>
    %cst_29 = arith.constant 1.700000e-01 : f32
    %41 = vector.broadcast %cst_29 : f32 to vector<2x2xf32>
    %42 = arith.mulf %41, %2 : vector<2x2xf32>
    %43 = arith.addf %40, %42 : vector<2x2xf32>
    %cst_30 = arith.constant -1.000000e+00 : f32
    %cst_31 = arith.constant 1.000000e+00 : f32
    %44 = vector.broadcast %cst_30 : f32 to vector<2x2xf32>
    %45 = arith.maximumf %44, %43 : vector<2x2xf32>
    %46 = vector.broadcast %cst_31 : f32 to vector<2x2xf32>
    %47 = arith.minimumf %46, %45 : vector<2x2xf32>
    %48 = arith.mulf %2, %2 : vector<2x2xf32>
    %cst_32 = arith.constant dense<0.000000e+00> : vector<2xf32>
    %49 = vector.multi_reduction <add>, %48, %cst_32 [1] : vector<2x2xf32> to vector<2xf32>
    %50 = vector.shape_cast %49 : vector<2xf32> to vector<2x1xf32>
    %cst_33 = arith.constant -5.000000e-01 : f32
    %51 = vector.broadcast %cst_33 : f32 to vector<2x1xf32>
    %52 = arith.mulf %51, %50 : vector<2x1xf32>
    %cst_34 = arith.constant 1.70603657 : f32
    %53 = vector.broadcast %cst_34 : f32 to vector<2x1xf32>
    %54 = arith.addf %52, %53 : vector<2x1xf32>
    %cst_35 = arith.constant dense<0xFF800000> : vector<2xf32>
    %55 = vector.multi_reduction <maximumf>, %34, %cst_35 [1] : vector<2x10xf32> to vector<2xf32>
    %56 = vector.shape_cast %55 : vector<2xf32> to vector<2x1xf32>
    %57 = vector.broadcast %56 : vector<2x1xf32> to vector<2x10xf32>
    %58 = arith.subf %34, %57 : vector<2x10xf32>
    %59 = math.exp %58 : vector<2x10xf32>
    %cst_36 = arith.constant dense<0.000000e+00> : vector<2xf32>
    %60 = vector.multi_reduction <add>, %59, %cst_36 [1] : vector<2x10xf32> to vector<2xf32>
    %61 = vector.shape_cast %60 : vector<2xf32> to vector<2x1xf32>
    %62 = math.log %61 : vector<2x1xf32>
    %63 = vector.broadcast %62 : vector<2x1xf32> to vector<2x10xf32>
    %64 = arith.subf %58, %63 : vector<2x10xf32>
    %cst_37 = arith.constant 0.000000e+00 : f32
    %65 = vector.broadcast %cst_37 : f32 to vector<2x82xf32>
    %66 = tpu.concatenate %24, %64, %47, %33, %54, %65 in 1 : vector<2x32xf32>, vector<2x10xf32>, vector<2x2xf32>, vector<2x1xf32>, vector<2x1xf32>, vector<2x82xf32> -> vector<2x128xf32>
    %c0_38 = arith.constant 0 : index
    %c0_39 = arith.constant 0 : index
    %67 = vector.load %arg11[%c0_38, %c0_39] : memref<2x128xf32, #tpu.memory_space<vmem>>, vector<2x128xf32>
    tpu.vector_store %arg11[%c0_38, %c0_39], %66 {strides = array<i32>} : memref<2x128xf32, #tpu.memory_space<vmem>>, vector<2x128xf32>,
    return
  }
}

</mosaic_0001>

<llo_original>
// kernel: custom-call
$region0: #{custom-call}
  %s0 = inlined_call_operand.vmem [shape: f32[2,1,4,4], index: 0, kind: output, shape index: {}]

// kernel: custom-call.1
$region0: #{custom-call.1}
  %s0 = inlined_call_operand.vmem [shape: f32[2,1,8,8], index: 0, kind: output, shape index: {}]

// kernel: _lambda_.1
$region0: #{_lambda_.1}
  #allocation0 [shape = 'u32[]', space=smem, size = 0x4, offset = 0x4, fixed_abs, tag = 'smem constant byte address 0x4 - core index']
  #allocation1 [shape = 'u32[144,128]{1,0:T(1,128)}', space=vmem, size = 0x12000, scoped, tag = 'internal scratch']
  %s0 = inlined_call_operand.vmem [shape: f32[2,128], index: 0, kind: input, shape index: {}]
  %s1 = inlined_call_operand.vmem [shape: f32[128,32], index: 1, kind: input, shape index: {}]
  %s2 = inlined_call_operand.vmem [shape: f32[1,32], index: 2, kind: input, shape index: {}]
  %s3 = inlined_call_operand.vmem [shape: f32[32,32], index: 3, kind: input, shape index: {}]
  %s4 = inlined_call_operand.vmem [shape: f32[1,32], index: 4, kind: input, shape index: {}]
  %s5 = inlined_call_operand.vmem [shape: f32[64,32], index: 5, kind: input, shape index: {}]
  %s6 = inlined_call_operand.vmem [shape: f32[1,32], index: 6, kind: input, shape index: {}]
  %s7 = inlined_call_operand.vmem [shape: f32[32,27], index: 7, kind: input, shape index: {}]
  %s8 = inlined_call_operand.vmem [shape: f32[1,27], index: 8, kind: input, shape index: {}]
  %s9 = inlined_call_operand.vmem [shape: f32[16,2], index: 9, kind: input, shape index: {}]
  %s10 = inlined_call_operand.vmem [shape: f32[1,2], index: 10, kind: input, shape index: {}]
  %s11 = inlined_call_operand.vmem [shape: f32[2,128], index: 11, kind: output, shape index: {}]
  %s12 = sld [smem:[#allocation0]]
  $region54: #{_lambda_.1} parent=0
    _
  %s14 = ssub.s32 1, %s12
  %s15 = scalar_select 0, %s14, %s12
  // Predicated region
  $region2: #{_lambda_.1} parent=0 // pred_check
    _
  $region3: #{_lambda_.1} parent=0 // pred_check_branch
    %17 = sbr.rel (0) target = $region5
  $region4: #{_lambda_.1} parent=0 // pred_region
    _
  $region5: #{_lambda_.1} parent=0 // pred_fallthru
    _
  // Predicated region
  $region6: #{_lambda_.1} parent=0 // pred_check
    _
  $region7: #{_lambda_.1} parent=0 // pred_check_branch
    %19 = sbr.rel (0) target = $region9
  $region8: #{_lambda_.1} parent=0 // pred_region
    _
  $region9: #{_lambda_.1} parent=0 // pred_fallthru
    _
  // Predicated region
  $region10: #{_lambda_.1} parent=0 // pred_check
    _
  $region11: #{_lambda_.1} parent=0 // pred_check_branch
    %21 = sbr.rel (0) target = $region13
  $region12: #{_lambda_.1} parent=0 // pred_region
    _
  $region13: #{_lambda_.1} parent=0 // pred_fallthru
    _
  // Predicated region
  $region14: #{_lambda_.1} parent=0 // pred_check
    _
  $region15: #{_lambda_.1} parent=0 // pred_check_branch
    %23 = sbr.rel (0) target = $region17
  $region16: #{_lambda_.1} parent=0 // pred_region
    _
  $region17: #{_lambda_.1} parent=0 // pred_fallthru
    _
  // Predicated region
  $region18: #{_lambda_.1} parent=0 // pred_check
    _
  $region19: #{_lambda_.1} parent=0 // pred_check_branch
    %25 = sbr.rel (0) target = $region21
  $region20: #{_lambda_.1} parent=0 // pred_region
    _
  $region21: #{_lambda_.1} parent=0 // pred_fallthru
    _
  // Predicated region
  $region22: #{_lambda_.1} parent=0 // pred_check
    _
  $region23: #{_lambda_.1} parent=0 // pred_check_branch
    %27 = sbr.rel (0) target = $region25
  $region24: #{_lambda_.1} parent=0 // pred_region
    _
  $region25: #{_lambda_.1} parent=0 // pred_fallthru
    _
  // Predicated region
  $region26: #{_lambda_.1} parent=0 // pred_check
    _
  $region27: #{_lambda_.1} parent=0 // pred_check_branch
    %29 = sbr.rel (0) target = $region29
  $region28: #{_lambda_.1} parent=0 // pred_region
    _
  $region29: #{_lambda_.1} parent=0 // pred_fallthru
    _
  // Predicated region
  $region30: #{_lambda_.1} parent=0 // pred_check
    _
  $region31: #{_lambda_.1} parent=0 // pred_check_branch
    %31 = sbr.rel (0) target = $region33
  $region32: #{_lambda_.1} parent=0 // pred_region
    _
  $region33: #{_lambda_.1} parent=0 // pred_fallthru
    _
  // Predicated region
  $region34: #{_lambda_.1} parent=0 // pred_check
    _
  $region35: #{_lambda_.1} parent=0 // pred_check_branch
    %33 = sbr.rel (0) target = $region37
  $region36: #{_lambda_.1} parent=0 // pred_region
    _
  $region37: #{_lambda_.1} parent=0 // pred_fallthru
    _
  // Predicated region
  $region38: #{_lambda_.1} parent=0 // pred_check
    _
  $region39: #{_lambda_.1} parent=0 // pred_check_branch
    %35 = sbr.rel (0) target = $region41
  $region40: #{_lambda_.1} parent=0 // pred_region
    _
  $region41: #{_lambda_.1} parent=0 // pred_fallthru
    _
  // Predicated region
  $region42: #{_lambda_.1} parent=0 // pred_check
    _
  $region43: #{_lambda_.1} parent=0 // pred_check_branch
    %37 = sbr.rel (0) target = $region45
  $region44: #{_lambda_.1} parent=0 // pred_region
    _
  $region45: #{_lambda_.1} parent=0 // pred_fallthru
    _
  %v38 = vld [vmem:[%s0] sm:$0x3]
  %v39 = vld [vmem:[%s1] sm:$0xff]
  %v40 = vld [vmem:[%s1 + $0x8] sm:$0xff]
  %v41 = vld [vmem:[%s1 + $0x10] sm:$0xff]
  %v42 = vld [vmem:[%s1 + $0x18] sm:$0xff]
  %v43 = vld [vmem:[%s1 + $0x20] sm:$0xff]
  %v44 = vld [vmem:[%s1 + $0x28] sm:$0xff]
  %v45 = vld [vmem:[%s1 + $0x30] sm:$0xff]
  %v46 = vld [vmem:[%s1 + $0x38] sm:$0xff]
  %v47 = vld [vmem:[%s1 + $0x40] sm:$0xff]
  %v48 = vld [vmem:[%s1 + $0x48] sm:$0xff]
  %v49 = vld [vmem:[%s1 + $0x50] sm:$0xff]
  %v50 = vld [vmem:[%s1 + $0x58] sm:$0xff]
  %v51 = vld [vmem:[%s1 + $0x60] sm:$0xff]
  %v52 = vld [vmem:[%s1 + $0x68] sm:$0xff]
  %v53 = vld [vmem:[%s1 + $0x70] sm:$0xff]
  %v54 = vld [vmem:[%s1 + $0x78] sm:$0xff]
  %v55 = vld [vmem:[%s2] sm:$0x1]
  %v57 = vlaneseq
  %v58 = vshrl.u32 %v57, 7
  %v59 = vsub.s32 0, %v58
  %v60 = vrot.slane %v55, %v59
  %62 = vmatprep.subr.mxu0 0.0
  %63 = vmatpush1.msra.mxu0 %v39
  %64 = vmatprep.subr.mxu0 0.0
  %65 = vmatpush1.msra.mxu0 %v40
  %66 = vmatprep.subr.mxu0 0.0
  %67 = vmatpush1.msra.mxu0 %v41
  %68 = vmatprep.subr.mxu0 0.0
  %69 = vmatpush1.msra.mxu0 %v42
  %70 = vmatprep.subr.mxu0 0.0
  %71 = vmatpush1.msra.mxu0 %v43
  %72 = vmatprep.subr.mxu0 0.0
  %73 = vmatpush1.msra.mxu0 %v44
  %74 = vmatprep.subr.mxu0 0.0
  %75 = vmatpush1.msra.mxu0 %v45
  %76 = vmatprep.subr.mxu0 0.0
  %77 = vmatpush1.msra.mxu0 %v46
  %78 = vmatprep.subr.mxu0 0.0
  %79 = vmatpush1.msra.mxu0 %v47
  %80 = vmatprep.subr.mxu0 0.0
  %81 = vmatpush1.msra.mxu0 %v48
  %82 = vmatprep.subr.mxu0 0.0
  %83 = vmatpush1.msra.mxu0 %v49
  %84 = vmatprep.subr.mxu0 0.0
  %85 = vmatpush1.msra.mxu0 %v50
  %86 = vmatprep.subr.mxu0 0.0
  %87 = vmatpush1.msra.mxu0 %v51
  %88 = vmatprep.subr.mxu0 0.0
  %89 = vmatpush1.msra.mxu0 %v52
  %90 = vmatprep.subr.mxu0 0.0
  %91 = vmatpush1.msra.mxu0 %v53
  %92 = vmatprep.subr.mxu0 0.0
  %93 = vmatpush1.msra.mxu0 %v54
  %94 = vmatprep.subr.mxu0 0.0
  %95 = vmatpush1.msra.mxu0 0.0
  %96 = vmatprep.subr.mxu0 0.0
  %97 = vmatpush1.msra.mxu0 0.0
  %98 = vmatprep.subr.mxu0 0.0
  %99 = vmatpush1.msra.mxu0 0.0
  %100 = vmatprep.subr.mxu0 0.0
  %101 = vmatpush1.msra.mxu0 0.0
  %102 = vmatprep.subr.mxu0 0.0
  %103 = vmatpush1.msra.mxu0 0.0
  %104 = vmatprep.subr.mxu0 0.0
  %105 = vmatpush1.msra.mxu0 0.0
  %106 = vmatprep.subr.mxu0 0.0
  %107 = vmatpush1.msra.mxu0 0.0
  %108 = vmatprep.subr.mxu0 0.0
  %109 = vmatpush1.msra.mxu0 0.0
  %110 = vmatprep.subr.mxu0 0.0
  %111 = vmatpush1.msra.mxu0 0.0
  %112 = vmatprep.subr.mxu0 0.0
  %113 = vmatpush1.msra.mxu0 0.0
  %114 = vmatprep.subr.mxu0 0.0
  %115 = vmatpush1.msra.mxu0 0.0
  %116 = vmatprep.subr.mxu0 0.0
  %117 = vmatpush1.msra.mxu0 0.0
  %118 = vmatprep.subr.mxu0 0.0
  %119 = vmatpush1.msra.mxu0 0.0
  %120 = vmatprep.subr.mxu0 0.0
  %121 = vmatpush1.msra.mxu0 0.0
  %122 = vmatprep.subr.mxu0 0.0
  %123 = vmatpush1.msra.mxu0 0.0
  %124 = vmatprep.subr.mxu0 0.0
  %125 = vmatpush1.msra.mxu0 0.0
  %126 = vmatprep.mubr.f32.mxu0 0.0
  %127 = vmatmul.mubr.f32.gmra.mrb[0].mxu0 %v38
  %v128 = vpop.f32.mrb[0].mxu0
  %v129 = vadd.f32 %v60, %v128
  %v130 = vpop.f32.mrb[0].mxu0
  %131 = vdwg.mxu0
  %v132 = vmax.f32 %v129, 0.0
  %v133 = vld [vmem:[%s3] sm:$0xff]
  %v134 = vld [vmem:[%s3 + $0x8] sm:$0xff]
  %v135 = vld [vmem:[%s3 + $0x10] sm:$0xff]
  %v136 = vld [vmem:[%s3 + $0x18] sm:$0xff]
  %v137 = vld [vmem:[%s4] sm:$0x1]
  %v139 = vlaneseq
  %v140 = vshrl.u32 %v139, 7
  %v141 = vsub.s32 0, %v140
  %v142 = vrot.slane %v137, %v141
  %vm144 = vcmask 261120
  %v146 = vsel %vm144, %v132, 0
  %148 = vmatprep.subr.mxu0 0.0
  %149 = vmatpush1.msra.mxu0 %v133
  %150 = vmatprep.subr.mxu0 0.0
  %151 = vmatpush1.msra.mxu0 %v134
  %152 = vmatprep.subr.mxu0 0.0
  %153 = vmatpush1.msra.mxu0 %v135
  %154 = vmatprep.subr.mxu0 0.0
  %155 = vmatpush1.msra.mxu0 %v136
  %156 = vmatprep.subr.mxu0 0.0
  %157 = vmatpush1.msra.mxu0 0.0
  %158 = vmatprep.subr.mxu0 0.0
  %159 = vmatpush1.msra.mxu0 0.0
  %160 = vmatprep.subr.mxu0 0.0
  %161 = vmatpush1.msra.mxu0 0.0
  %162 = vmatprep.subr.mxu0 0.0
  %163 = vmatpush1.msra.mxu0 0.0
  %164 = vmatprep.subr.mxu0 0.0
  %165 = vmatpush1.msra.mxu0 0.0
  %166 = vmatprep.subr.mxu0 0.0
  %167 = vmatpush1.msra.mxu0 0.0
  %168 = vmatprep.subr.mxu0 0.0
  %169 = vmatpush1.msra.mxu0 0.0
  %170 = vmatprep.subr.mxu0 0.0
  %171 = vmatpush1.msra.mxu0 0.0
  %172 = vmatprep.subr.mxu0 0.0
  %173 = vmatpush1.msra.mxu0 0.0
  %174 = vmatprep.subr.mxu0 0.0
  %175 = vmatpush1.msra.mxu0 0.0
  %176 = vmatprep.subr.mxu0 0.0
  %177 = vmatpush1.msra.mxu0 0.0
  %178 = vmatprep.subr.mxu0 0.0
  %179 = vmatpush1.msra.mxu0 0.0
  %180 = vmatprep.subr.mxu0 0.0
  %181 = vmatpush1.msra.mxu0 0.0
  %182 = vmatprep.subr.mxu0 0.0
  %183 = vmatpush1.msra.mxu0 0.0
  %184 = vmatprep.subr.mxu0 0.0
  %185 = vmatpush1.msra.mxu0 0.0
  %186 = vmatprep.subr.mxu0 0.0
  %187 = vmatpush1.msra.mxu0 0.0
  %188 = vmatprep.subr.mxu0 0.0
  %189 = vmatpush1.msra.mxu0 0.0
  %190 = vmatprep.subr.mxu0 0.0
  %191 = vmatpush1.msra.mxu0 0.0
  %192 = vmatprep.subr.mxu0 0.0
  %193 = vmatpush1.msra.mxu0 0.0
  %194 = vmatprep.subr.mxu0 0.0
  %195 = vmatpush1.msra.mxu0 0.0
  %196 = vmatprep.subr.mxu0 0.0
  %197 = vmatpush1.msra.mxu0 0.0
  %198 = vmatprep.subr.mxu0 0.0
  %199 = vmatpush1.msra.mxu0 0.0
  %200 = vmatprep.subr.mxu0 0.0
  %201 = vmatpush1.msra.mxu0 0.0
  %202 = vmatprep.subr.mxu0 0.0
  %203 = vmatpush1.msra.mxu0 0.0
  %204 = vmatprep.subr.mxu0 0.0
  %205 = vmatpush1.msra.mxu0 0.0
  %206 = vmatprep.subr.mxu0 0.0
  %207 = vmatpush1.msra.mxu0 0.0
  %208 = vmatprep.subr.mxu0 0.0
  %209 = vmatpush1.msra.mxu0 0.0
  %210 = vmatprep.subr.mxu0 0.0
  %211 = vmatpush1.msra.mxu0 0.0
  %212 = vmatprep.mubr.f32.mxu0 0.0
  %213 = vmatmul.mubr.f32.gmra.mrb[0].mxu0 %v146
  %v214 = vpop.f32.mrb[0].mxu0
  %v215 = vadd.f32 %v142, %v214
  %v216 = vpop.f32.mrb[0].mxu0
  %217 = vdwg.mxu0
  %v218 = vmax.f32 %v215, 0.0
  %220 = vrot.lane.b32.xlu0 %v38, 32
  %v221 = vpop.permute.xlu0 %220
  %v223 = vsel %vm144, %v218, %v221
  %v224 = vld [vmem:[%s5] sm:$0xff]
  %v225 = vld [vmem:[%s5 + $0x8] sm:$0xff]
  %v226 = vld [vmem:[%s5 + $0x10] sm:$0xff]
  %v227 = vld [vmem:[%s5 + $0x18] sm:$0xff]
  %v228 = vld [vmem:[%s5 + $0x20] sm:$0xff]
  %v229 = vld [vmem:[%s5 + $0x28] sm:$0xff]
  %v230 = vld [vmem:[%s5 + $0x30] sm:$0xff]
  %v231 = vld [vmem:[%s5 + $0x38] sm:$0xff]
  %v232 = vld [vmem:[%s6] sm:$0x1]
  %v234 = vlaneseq
  %v235 = vshrl.u32 %v234, 7
  %v236 = vsub.s32 0, %v235
  %v237 = vrot.slane %v232, %v236
  %vm239 = vcmask 523264
  %v241 = vsel %vm239, %v223, 0
  %243 = vmatprep.subr.mxu0 0.0
  %244 = vmatpush1.msra.mxu0 %v224
  %245 = vmatprep.subr.mxu0 0.0
  %246 = vmatpush1.msra.mxu0 %v225
  %247 = vmatprep.subr.mxu0 0.0
  %248 = vmatpush1.msra.mxu0 %v226
  %249 = vmatprep.subr.mxu0 0.0
  %250 = vmatpush1.msra.mxu0 %v227
  %251 = vmatprep.subr.mxu0 0.0
  %252 = vmatpush1.msra.mxu0 %v228
  %253 = vmatprep.subr.mxu0 0.0
  %254 = vmatpush1.msra.mxu0 %v229
  %255 = vmatprep.subr.mxu0 0.0
  %256 = vmatpush1.msra.mxu0 %v230
  %257 = vmatprep.subr.mxu0 0.0
  %258 = vmatpush1.msra.mxu0 %v231
  %259 = vmatprep.subr.mxu0 0.0
  %260 = vmatpush1.msra.mxu0 0.0
  %261 = vmatprep.subr.mxu0 0.0
  %262 = vmatpush1.msra.mxu0 0.0
  %263 = vmatprep.subr.mxu0 0.0
  %264 = vmatpush1.msra.mxu0 0.0
  %265 = vmatprep.subr.mxu0 0.0
  %266 = vmatpush1.msra.mxu0 0.0
  %267 = vmatprep.subr.mxu0 0.0
  %268 = vmatpush1.msra.mxu0 0.0
  %269 = vmatprep.subr.mxu0 0.0
  %270 = vmatpush1.msra.mxu0 0.0
  %271 = vmatprep.subr.mxu0 0.0
  %272 = vmatpush1.msra.mxu0 0.0
  %273 = vmatprep.subr.mxu0 0.0
  %274 = vmatpush1.msra.mxu0 0.0
  %275 = vmatprep.subr.mxu0 0.0
  %276 = vmatpush1.msra.mxu0 0.0
  %277 = vmatprep.subr.mxu0 0.0
  %278 = vmatpush1.msra.mxu0 0.0
  %279 = vmatprep.subr.mxu0 0.0
  %280 = vmatpush1.msra.mxu0 0.0
  %281 = vmatprep.subr.mxu0 0.0
  %282 = vmatpush1.msra.mxu0 0.0
  %283 = vmatprep.subr.mxu0 0.0
  %284 = vmatpush1.msra.mxu0 0.0
  %285 = vmatprep.subr.mxu0 0.0
  %286 = vmatpush1.msra.mxu0 0.0
  %287 = vmatprep.subr.mxu0 0.0
  %288 = vmatpush1.msra.mxu0 0.0
  %289 = vmatprep.subr.mxu0 0.0
  %290 = vmatpush1.msra.mxu0 0.0
  %291 = vmatprep.subr.mxu0 0.0
  %292 = vmatpush1.msra.mxu0 0.0
  %293 = vmatprep.subr.mxu0 0.0
  %294 = vmatpush1.msra.mxu0 0.0
  %295 = vmatprep.subr.mxu0 0.0
  %296 = vmatpush1.msra.mxu0 0.0
  %297 = vmatprep.subr.mxu0 0.0
  %298 = vmatpush1.msra.mxu0 0.0
  %299 = vmatprep.subr.mxu0 0.0
  %300 = vmatpush1.msra.mxu0 0.0
  %301 = vmatprep.subr.mxu0 0.0
  %302 = vmatpush1.msra.mxu0 0.0
  %303 = vmatprep.subr.mxu0 0.0
  %304 = vmatpush1.msra.mxu0 0.0
  %305 = vmatprep.subr.mxu0 0.0
  %306 = vmatpush1.msra.mxu0 0.0
  %307 = vmatprep.mubr.f32.mxu0 0.0
  %308 = vmatmul.mubr.f32.gmra.mrb[0].mxu0 %v241
  %v309 = vpop.f32.mrb[0].mxu0
  %v310 = vadd.f32 %v237, %v309
  %v311 = vpop.f32.mrb[0].mxu0
  %312 = vdwg.mxu0
  %v313 = vmax.f32 %v310, 0.0
  %v314 = vld [vmem:[%s7] sm:$0xff]
  %v315 = vld [vmem:[%s7 + $0x8] sm:$0xff]
  %v316 = vld [vmem:[%s7 + $0x10] sm:$0xff]
  %v317 = vld [vmem:[%s7 + $0x18] sm:$0xff]
  %v318 = vld [vmem:[%s8] sm:$0x1]
  %v320 = vlaneseq
  %v321 = vshrl.u32 %v320, 7
  %v322 = vsub.s32 0, %v321
  %v323 = vrot.slane %v318, %v322
  %v326 = vsel %vm144, %v313, 0
  %328 = vmatprep.subr.mxu0 0.0
  %329 = vmatpush1.msra.mxu0 %v314
  %330 = vmatprep.subr.mxu0 0.0
  %331 = vmatpush1.msra.mxu0 %v315
  %332 = vmatprep.subr.mxu0 0.0
  %333 = vmatpush1.msra.mxu0 %v316
  %334 = vmatprep.subr.mxu0 0.0
  %335 = vmatpush1.msra.mxu0 %v317
  %336 = vmatprep.subr.mxu0 0.0
  %337 = vmatpush1.msra.mxu0 0.0
  %338 = vmatprep.subr.mxu0 0.0
  %339 = vmatpush1.msra.mxu0 0.0
  %340 = vmatprep.subr.mxu0 0.0
  %341 = vmatpush1.msra.mxu0 0.0
  %342 = vmatprep.subr.mxu0 0.0
  %343 = vmatpush1.msra.mxu0 0.0
  %344 = vmatprep.subr.mxu0 0.0
  %345 = vmatpush1.msra.mxu0 0.0
  %346 = vmatprep.subr.mxu0 0.0
  %347 = vmatpush1.msra.mxu0 0.0
  %348 = vmatprep.subr.mxu0 0.0
  %349 = vmatpush1.msra.mxu0 0.0
  %350 = vmatprep.subr.mxu0 0.0
  %351 = vmatpush1.msra.mxu0 0.0
  %352 = vmatprep.subr.mxu0 0.0
  %353 = vmatpush1.msra.mxu0 0.0
  %354 = vmatprep.subr.mxu0 0.0
  %355 = vmatpush1.msra.mxu0 0.0
  %356 = vmatprep.subr.mxu0 0.0
  %357 = vmatpush1.msra.mxu0 0.0
  %358 = vmatprep.subr.mxu0 0.0
  %359 = vmatpush1.msra.mxu0 0.0
  %360 = vmatprep.subr.mxu0 0.0
  %361 = vmatpush1.msra.mxu0 0.0
  %362 = vmatprep.subr.mxu0 0.0
  %363 = vmatpush1.msra.mxu0 0.0
  %364 = vmatprep.subr.mxu0 0.0
  %365 = vmatpush1.msra.mxu0 0.0
  %366 = vmatprep.subr.mxu0 0.0
  %367 = vmatpush1.msra.mxu0 0.0
  %368 = vmatprep.subr.mxu0 0.0
  %369 = vmatpush1.msra.mxu0 0.0
  %370 = vmatprep.subr.mxu0 0.0
  %371 = vmatpush1.msra.mxu0 0.0
  %372 = vmatprep.subr.mxu0 0.0
  %373 = vmatpush1.msra.mxu0 0.0
  %374 = vmatprep.subr.mxu0 0.0
  %375 = vmatpush1.msra.mxu0 0.0
  %376 = vmatprep.subr.mxu0 0.0
  %377 = vmatpush1.msra.mxu0 0.0
  %378 = vmatprep.subr.mxu0 0.0
  %379 = vmatpush1.msra.mxu0 0.0
  %380 = vmatprep.subr.mxu0 0.0
  %381 = vmatpush1.msra.mxu0 0.0
  %382 = vmatprep.subr.mxu0 0.0
  %383 = vmatpush1.msra.mxu0 0.0
  %384 = vmatprep.subr.mxu0 0.0
  %385 = vmatpush1.msra.mxu0 0.0
  %386 = vmatprep.subr.mxu0 0.0
  %387 = vmatpush1.msra.mxu0 0.0
  %388 = vmatprep.subr.mxu0 0.0
  %389 = vmatpush1.msra.mxu0 0.0
  %390 = vmatprep.subr.mxu0 0.0
  %391 = vmatpush1.msra.mxu0 0.0
  %392 = vmatprep.mubr.f32.mxu0 0.0
  %393 = vmatmul.mubr.f32.gmra.mrb[0].mxu0 %v326
  %v394 = vpop.f32.mrb[0].mxu0
  %v395 = vadd.f32 %v323, %v394
  %v396 = vpop.f32.mrb[0].mxu0
  %397 = vdwg.mxu0
  %v398 = vmax.f32 %v395, 0.0
  %v399 = vld [vmem:[%s9] sm:$0xff]
  %v400 = vld [vmem:[%s9 + $0x8] sm:$0xff]
  %v401 = vld [vmem:[%s10] sm:$0x1]
  %v403 = vlaneseq
  %v404 = vshrl.u32 %v403, 7
  %v405 = vsub.s32 0, %v404
  %v406 = vrot.slane %v401, %v405
  %vm408 = vcmask 130048
  %v410 = vsel %vm408, %v398, 0
  %412 = vmatprep.subr.mxu0 0.0
  %413 = vmatpush1.msra.mxu0 %v399
  %414 = vmatprep.subr.mxu0 0.0
  %415 = vmatpush1.msra.mxu0 %v400
  %416 = vmatprep.subr.mxu0 0.0
  %417 = vmatpush1.msra.mxu0 0.0
  %418 = vmatprep.subr.mxu0 0.0
  %419 = vmatpush1.msra.mxu0 0.0
  %420 = vmatprep.subr.mxu0 0.0
  %421 = vmatpush1.msra.mxu0 0.0
  %422 = vmatprep.subr.mxu0 0.0
  %423 = vmatpush1.msra.mxu0 0.0
  %424 = vmatprep.subr.mxu0 0.0
  %425 = vmatpush1.msra.mxu0 0.0
  %426 = vmatprep.subr.mxu0 0.0
  %427 = vmatpush1.msra.mxu0 0.0
  %428 = vmatprep.subr.mxu0 0.0
  %429 = vmatpush1.msra.mxu0 0.0
  %430 = vmatprep.subr.mxu0 0.0
  %431 = vmatpush1.msra.mxu0 0.0
  %432 = vmatprep.subr.mxu0 0.0
  %433 = vmatpush1.msra.mxu0 0.0
  %434 = vmatprep.subr.mxu0 0.0
  %435 = vmatpush1.msra.mxu0 0.0
  %436 = vmatprep.subr.mxu0 0.0
  %437 = vmatpush1.msra.mxu0 0.0
  %438 = vmatprep.subr.mxu0 0.0
  %439 = vmatpush1.msra.mxu0 0.0
  %440 = vmatprep.subr.mxu0 0.0
  %441 = vmatpush1.msra.mxu0 0.0
  %442 = vmatprep.subr.mxu0 0.0
  %443 = vmatpush1.msra.mxu0 0.0
  %444 = vmatprep.subr.mxu0 0.0
  %445 = vmatpush1.msra.mxu0 0.0
  %446 = vmatprep.subr.mxu0 0.0
  %447 = vmatpush1.msra.mxu0 0.0
  %448 = vmatprep.subr.mxu0 0.0
  %449 = vmatpush1.msra.mxu0 0.0
  %450 = vmatprep.subr.mxu0 0.0
  %451 = vmatpush1.msra.mxu0 0.0
  %452 = vmatprep.subr.mxu0 0.0
  %453 = vmatpush1.msra.mxu0 0.0
  %454 = vmatprep.subr.mxu0 0.0
  %455 = vmatpush1.msra.mxu0 0.0
  %456 = vmatprep.subr.mxu0 0.0
  %457 = vmatpush1.msra.mxu0 0.0
  %458 = vmatprep.subr.mxu0 0.0
  %459 = vmatpush1.msra.mxu0 0.0
  %460 = vmatprep.subr.mxu0 0.0
  %461 = vmatpush1.msra.mxu0 0.0
  %462 = vmatprep.subr.mxu0 0.0
  %463 = vmatpush1.msra.mxu0 0.0
  %464 = vmatprep.subr.mxu0 0.0
  %465 = vmatpush1.msra.mxu0 0.0
  %466 = vmatprep.subr.mxu0 0.0
  %467 = vmatpush1.msra.mxu0 0.0
  %468 = vmatprep.subr.mxu0 0.0
  %469 = vmatpush1.msra.mxu0 0.0
  %470 = vmatprep.subr.mxu0 0.0
  %471 = vmatpush1.msra.mxu0 0.0
  %472 = vmatprep.subr.mxu0 0.0
  %473 = vmatpush1.msra.mxu0 0.0
  %474 = vmatprep.subr.mxu0 0.0
  %475 = vmatpush1.msra.mxu0 0.0
  %476 = vmatprep.mubr.f32.mxu0 0.0
  %477 = vmatmul.mubr.f32.gmra.mrb[0].mxu0 %v410
  %v478 = vpop.f32.mrb[0].mxu0
  %v479 = vadd.f32 %v406, %v478
  %v480 = vpop.f32.mrb[0].mxu0
  %481 = vdwg.mxu0
  %v482 = vtanh.pop %v479
  %v483 = vmul.f32 %v38, 0.17
  %485 = vrot.lane.b32.xlu0 %v483, 62
  %v486 = vpop.permute.xlu0 %485
  %v488 = vadd.f32 %v482, %v486
  %v489 = vmax.f32 %v488, -1.0
  %v490 = vmin.f32 %v489, 1.0
  %v491 = vmul.f32 %v38, %v38
  %493 = vrot.lane.b32.xlu0 %v491, 62
  %v494 = vpop.permute.xlu0 %493
  %vm496 = vcmask 9216
  %v497 = vsel %vm496, %v494, 0.0
  %498 = vadd.xlane.f32.xlu0 %v497
  %v499 = vpop.xlane.xlu0 %498
  %v500 = vmul.f32 %v499, -0.5
  %v501 = vadd.f32 %v500, 1.7060366
  %vm502 = vcmask 214152
  %v503 = vsel %vm502, %v395, -inf
  %504 = vmax.xlane.f32.xlu0 %v503
  %v505 = vpop.xlane.xlu0 %504
  %v506 = vsub.f32 %v395, %v505
  %v507 = vmul.f32 %v506, 1.442695
  %v508 = vpow.pop %v507
  %510 = vrot.lane.b32.xlu0 %v508, 111
  %v511 = vpop.permute.xlu0 %510
  %vm513 = vcmask 74752
  %v514 = vsel %vm513, %v511, 0.0
  %515 = vadd.xlane.f32.xlu0 %v514
  %v516 = vpop.xlane.xlu0 %515
  %v517 = vlog2.pop %v516
  %v518 = vmul.f32 %v517, 0.6931472
  %v519 = vsub.f32 %v506, %v518
  %521 = vrot.lane.b32.xlu0 %v519, 15
  %v522 = vpop.permute.xlu0 %521
  %525 = vrot.lane.b32.xlu0 %v490, 42
  %v526 = vpop.permute.xlu0 %525
  %529 = vrot.lane.b32.xlu0 %v395, 28
  %v530 = vpop.permute.xlu0 %529
  %v532 = vsel %vm144, %v313, %v522
  %vm533 = vcmask 343040
  %v534 = vsel %vm533, %v532, %v526
  %vm535 = vcmask 359424
  %v536 = vsel %vm535, %v534, %v530
  %vm537 = vcmask 367616
  %v538 = vsel %vm537, %v536, %v501
  %vm539 = vcmask 375808
  %v540 = vsel %vm539, %v538, 0.0
  %541 = vst [vmem:[%s11] sm:$0x3] %v540
  // Predicated region
  $region46: #{_lambda_.1} parent=0 // pred_check
    _
  $region47: #{_lambda_.1} parent=0 // pred_check_branch
    %543 = sbr.rel (0) target = $region49
  $region48: #{_lambda_.1} parent=0 // pred_region
    _
  $region49: #{_lambda_.1} parent=0 // pred_fallthru
    _
  // Predicated region
  $region50: #{_lambda_.1} parent=0 // pred_check
    _
  $region51: #{_lambda_.1} parent=0 // pred_check_branch
    %545 = sbr.rel (0) target = $region53
  $region52: #{_lambda_.1} parent=0 // pred_region
    _
  $region53: #{_lambda_.1} parent=0 // pred_fallthru
    _

</llo_original>
